<compile_context>
chip_gen: v5e
topology: v5e:2x2
jax: 0.10.0
libtpu: 0.0.40
codegen_flags: <defaults>
</compile_context>

<pallas_src>
import math

import numpy as np
import jax
import jax.numpy as jnp
from jax.experimental import pallas as pl
from jax.experimental.pallas import tpu as pltpu

_MiB = 1024 * 1024


def _round_down_128(n):
    return (n // 128) * 128


def _round_up_128(n):
    return ((n + 127) // 128) * 128


def _make_fourier_kernel(num_freqs, out_dtype, exact_trig):
    pi = math.pi  # scalar constants are inlined as literals (no captured consts)

    def kernel(x_ref, o_ref):
        # x_ref: (C, T) in the input's native dtype ; o_ref: (C, 2F, T)
        x = x_ref[...].astype(jnp.float32)  # in-kernel cast (free VPU work)
        if exact_trig:
            sin_rows = [jnp.sin((2.0 ** i * pi) * x) for i in range(num_freqs)]
            cos_rows = [jnp.cos((2.0 ** i * pi) * x) for i in range(num_freqs)]
        else:
            # Double-angle recurrence: freqs are exactly 2^i*pi, so one
            # polynomial sin/cos pair seeds every octave.  Absolute error grows
            # roughly ~2x per octave (still < ~1e-4 at F <= 8 in float32).
            s = jnp.sin(pi * x)
            c = jnp.cos(pi * x)
            sin_rows, cos_rows = [s], [c]
            for _ in range(num_freqs - 1):
                s, c = 2.0 * s * c, c * c - s * s
                sin_rows.append(s)
                cos_rows.append(c)
        enc = jnp.concatenate(
            [jnp.stack(sin_rows, axis=1), jnp.stack(cos_rows, axis=1)], axis=1
        )  # (C, 2F, T)
        # One full-block store (unmasked vst for complete 8-row sublane groups)
        # instead of two sublane-misaligned half-slab stores.
        o_ref[...] = enc.astype(out_dtype)

    return kernel


def _pick_tile(HW, C, num_freqs, in_itemsize, out_itemsize):
    """Lane tile (multiple of 128) sized from C, F, dtypes and the VMEM budget."""
    try:
        info = pltpu.get_tpu_info()
        vmem_cap = int(getattr(info, "vmem_capacity_bytes", 64 * _MiB))
    except Exception:
        vmem_cap = 64 * _MiB  # v7x worst case (smallest physical VMEM)

    # Per lane column: double-buffered input + output pipeline blocks, plus
    # roughly one extra output-block worth of in-kernel temporaries
    # (the stack/concatenate result that feeds the full-block store).
    bytes_per_lane = 2 * C * in_itemsize + 4 * C * 2 * num_freqs * out_itemsize

    budget = min(24 * _MiB, vmem_cap // 3)
    tile = _round_down_128(budget // bytes_per_lane)
    if tile < 512 and vmem_cap >= 96 * _MiB:
        # Large C*2F blocks: on v5e/v6e (128 MiB physical VMEM) spend more
        # scoped budget rather than shrinking below a lane-dense tile.
        budget = min(88 * _MiB, (2 * vmem_cap) // 3)
        tile = _round_down_128(budget // bytes_per_lane)
    # TODO(synk): for extreme C*2F (tile would fall below 128 even with the
    # raised budget) add C as a second grid axis with an 8-aligned C block.
    tile = max(128, min(2048, tile))

    # Never wider than the (rounded-up) spatial extent, and keep >= 2 lane grid
    # steps when there is enough data so both v7x TensorCores get work.
    tile = min(tile, _round_up_128(HW))
    if HW > 128:
        tile = min(tile, _round_up_128(pl.cdiv(HW, 2)))
    tile = max(128, tile)

    vmem_limit = int(
        max(
            32 * _MiB,
            min(tile * bytes_per_lane + 8 * _MiB, vmem_cap - 16 * _MiB, 96 * _MiB),
        )
    )
    return tile, vmem_limit


def fourier_encoding(x, num_freqs, *, tile=None, out_dtype=jnp.float32,
                     exact_trig=False):
    """Pallas TPU FourierEncoding.forward. x: [1, C, H, W] -> [1, C*2F, H, W]."""
    B, C, H, W = x.shape
    assert B == 1, "FourierEncoding's [1, F, 1, 1] broadcast requires batch == 1"
    HW = H * W
    F = num_freqs

    in_itemsize = np.dtype(x.dtype).itemsize
    out_itemsize = np.dtype(out_dtype).itemsize
    if tile is None:
        tile, vmem_limit = _pick_tile(HW, C, F, in_itemsize, out_itemsize)
    else:
        assert tile % 128 == 0, "tile must be a multiple of the 128-lane width"
        vmem_limit = 64 * _MiB

    x2 = x.reshape(C, HW)  # native dtype; the f32 cast happens in-kernel

    kernel = _make_fourier_kernel(F, out_dtype, exact_trig)

    out = pl.pallas_call(
        kernel,
        out_shape=jax.ShapeDtypeStruct((C, 2 * F, HW), out_dtype),
        grid_spec=pltpu.PrefetchScalarGridSpec(
            num_scalar_prefetch=0,
            grid=(pl.cdiv(HW, tile),),  # ragged last block is masked on writeback
            in_specs=[pl.BlockSpec((C, tile), lambda t: (0, t))],
            out_specs=pl.BlockSpec((C, 2 * F, tile), lambda t: (0, 0, t)),
        ),
        compiler_params=pltpu.CompilerParams(
            dimension_semantics=("parallel",),
            vmem_limit_bytes=vmem_limit,
        ),
    )(x2)

    # (C, 2F, HW) -> (1, C*2F, H, W).  Collapsing (C, 2F) is free; splitting HW
    # back into (H, W) may relayout the (8,128)-tiled minor dims outside the
    # kernel — unavoidable while honoring NCHW output for arbitrary W.
    return out.reshape(1, C * 2 * F, H, W)


def _reference_numpy(x, num_freqs):
    freqs = np.array(
        [2.0 ** i * np.pi for i in range(num_freqs)], dtype=np.float32
    )[None, :, None, None]
    xn = np.asarray(x)
    outs = []
    for i in range(xn.shape[1]):
        f = freqs * xn[:, i]
        outs.append(np.concatenate([np.sin(f), np.cos(f)], axis=1))
    return np.concatenate(outs, axis=1)


if __name__ == "__main__":
    num_freqs = 6

    # Case 1: lane-aligned spatial size (16*16 = 256 columns).
    x = jax.random.uniform(jax.random.PRNGKey(0), (1, 4, 16, 16),
                           dtype=jnp.float32, minval=-1.0, maxval=1.0)
    ref = _reference_numpy(x, num_freqs)
    out = jax.block_until_ready(fourier_encoding(x, num_freqs))
    assert out.shape == ref.shape, (out.shape, ref.shape)
    # Recurrence path: error grows with octave; ~1e-4 headroom at F=6.
    np.testing.assert_allclose(np.asarray(out), ref, rtol=1e-4, atol=1e-4)

    # Exact-trig path at tight tolerance (same kernel structure, direct sin/cos).
    out_exact = jax.block_until_ready(
        fourier_encoding(x, num_freqs, exact_trig=True))
    np.testing.assert_allclose(np.asarray(out_exact), ref, rtol=1e-5, atol=2e-5)

    # Case 2: non-128-aligned spatial size exercises the masked ragged block.
    x2 = jax.random.uniform(jax.random.PRNGKey(1), (1, 3, 10, 12),
                            dtype=jnp.float32, minval=-1.0, maxval=1.0)
    ref2 = _reference_numpy(x2, num_freqs)
    out2 = jax.block_until_ready(fourier_encoding(x2, num_freqs))
    assert out2.shape == ref2.shape, (out2.shape, ref2.shape)
    np.testing.assert_allclose(np.asarray(out2), ref2, rtol=1e-4, atol=1e-4)

    # Case 3: larger spatial extent exercises the multi-step (>=2) lane grid.
    x3 = jax.random.uniform(jax.random.PRNGKey(2), (1, 4, 48, 64),
                            dtype=jnp.float32, minval=-1.0, maxval=1.0)
    ref3 = _reference_numpy(x3, num_freqs)
    out3 = jax.block_until_ready(fourier_encoding(x3, num_freqs))
    assert out3.shape == ref3.shape, (out3.shape, ref3.shape)
    np.testing.assert_allclose(np.asarray(out3), ref3, rtol=1e-4, atol=1e-4)

    print("KERNEL_OK")
</pallas_src>

<mosaic_0001>
module attributes {stable_mosaic.version = 11 : i64} {
  func.func @kernel(%arg0: i32, %arg1: memref<4x128xf32, #tpu.memory_space<vmem>>, %arg2: memref<4x12x128xf32, #tpu.memory_space<vmem>>) attributes {dimension_semantics = [#tpu.dimension_semantics<parallel>], iteration_bounds = array<i64: 2>, scalar_prefetch = 0 : i64, scratch_operands = 0 : i64, tpu.core_type = #tpu.core_type<tc>, window_params = [{transform_indices = @transform_0, window_bounds = array<i64: 4, 128>}, {transform_indices = @transform_1, window_bounds = array<i64: 4, 12, 128>}]} {
    %c0 = arith.constant 0 : index
    %c0_0 = arith.constant 0 : index
    %0 = vector.load %arg1[%c0, %c0_0] : memref<4x128xf32, #tpu.memory_space<vmem>>, vector<4x128xf32>
    %cst = arith.constant 3.14159274 : f32
    %1 = vector.broadcast %cst : f32 to vector<4x128xf32>
    %2 = arith.mulf %1, %0 : vector<4x128xf32>
    %3 = math.sin %2 : vector<4x128xf32>
    %cst_1 = arith.constant 3.14159274 : f32
    %4 = vector.broadcast %cst_1 : f32 to vector<4x128xf32>
    %5 = arith.mulf %4, %0 : vector<4x128xf32>
    %6 = math.cos %5 : vector<4x128xf32>
    %cst_2 = arith.constant 2.000000e+00 : f32
    %7 = vector.broadcast %cst_2 : f32 to vector<4x128xf32>
    %8 = arith.mulf %7, %3 : vector<4x128xf32>
    %9 = arith.mulf %8, %6 : vector<4x128xf32>
    %10 = arith.mulf %6, %6 : vector<4x128xf32>
    %11 = arith.mulf %3, %3 : vector<4x128xf32>
    %12 = arith.subf %10, %11 : vector<4x128xf32>
    %cst_3 = arith.constant 2.000000e+00 : f32
    %13 = vector.broadcast %cst_3 : f32 to vector<4x128xf32>
    %14 = arith.mulf %13, %9 : vector<4x128xf32>
    %15 = arith.mulf %14, %12 : vector<4x128xf32>
    %16 = arith.mulf %12, %12 : vector<4x128xf32>
    %17 = arith.mulf %9, %9 : vector<4x128xf32>
    %18 = arith.subf %16, %17 : vector<4x128xf32>
    %cst_4 = arith.constant 2.000000e+00 : f32
    %19 = vector.broadcast %cst_4 : f32 to vector<4x128xf32>
    %20 = arith.mulf %19, %15 : vector<4x128xf32>
    %21 = arith.mulf %20, %18 : vector<4x128xf32>
    %22 = arith.mulf %18, %18 : vector<4x128xf32>
    %23 = arith.mulf %15, %15 : vector<4x128xf32>
    %24 = arith.subf %22, %23 : vector<4x128xf32>
    %cst_5 = arith.constant 2.000000e+00 : f32
    %25 = vector.broadcast %cst_5 : f32 to vector<4x128xf32>
    %26 = arith.mulf %25, %21 : vector<4x128xf32>
    %27 = arith.mulf %26, %24 : vector<4x128xf32>
    %28 = arith.mulf %24, %24 : vector<4x128xf32>
    %29 = arith.mulf %21, %21 : vector<4x128xf32>
    %30 = arith.subf %28, %29 : vector<4x128xf32>
    %cst_6 = arith.constant 2.000000e+00 : f32
    %31 = vector.broadcast %cst_6 : f32 to vector<4x128xf32>
    %32 = arith.mulf %31, %27 : vector<4x128xf32>
    %33 = arith.mulf %32, %30 : vector<4x128xf32>
    %34 = arith.mulf %30, %30 : vector<4x128xf32>
    %35 = arith.mulf %27, %27 : vector<4x128xf32>
    %36 = arith.subf %34, %35 : vector<4x128xf32>
    %37 = vector.shape_cast %3 : vector<4x128xf32> to vector<4x1x128xf32>
    %38 = vector.shape_cast %9 : vector<4x128xf32> to vector<4x1x128xf32>
    %39 = vector.shape_cast %15 : vector<4x128xf32> to vector<4x1x128xf32>
    %40 = vector.shape_cast %21 : vector<4x128xf32> to vector<4x1x128xf32>
    %41 = vector.shape_cast %27 : vector<4x128xf32> to vector<4x1x128xf32>
    %42 = vector.shape_cast %33 : vector<4x128xf32> to vector<4x1x128xf32>
    %43 = tpu.concatenate %37, %38, %39, %40, %41, %42 in 1 : vector<4x1x128xf32>, vector<4x1x128xf32>, vector<4x1x128xf32>, vector<4x1x128xf32>, vector<4x1x128xf32>, vector<4x1x128xf32> -> vector<4x6x128xf32>
    %44 = vector.shape_cast %6 : vector<4x128xf32> to vector<4x1x128xf32>
    %45 = vector.shape_cast %12 : vector<4x128xf32> to vector<4x1x128xf32>
    %46 = vector.shape_cast %18 : vector<4x128xf32> to vector<4x1x128xf32>
    %47 = vector.shape_cast %24 : vector<4x128xf32> to vector<4x1x128xf32>
    %48 = vector.shape_cast %30 : vector<4x128xf32> to vector<4x1x128xf32>
    %49 = vector.shape_cast %36 : vector<4x128xf32> to vector<4x1x128xf32>
    %50 = tpu.concatenate %44, %45, %46, %47, %48, %49 in 1 : vector<4x1x128xf32>, vector<4x1x128xf32>, vector<4x1x128xf32>, vector<4x1x128xf32>, vector<4x1x128xf32>, vector<4x1x128xf32> -> vector<4x6x128xf32>
    %51 = tpu.concatenate %43, %50 in 1 : vector<4x6x128xf32>, vector<4x6x128xf32> -> vector<4x12x128xf32>
    %c0_7 = arith.constant 0 : index
    %c0_8 = arith.constant 0 : index
    %c0_9 = arith.constant 0 : index
    %52 = vector.load %arg2[%c0_7, %c0_8, %c0_9] : memref<4x12x128xf32, #tpu.memory_space<vmem>>, vector<4x12x128xf32>
    tpu.vector_store %arg2[%c0_7, %c0_8, %c0_9], %51 {strides = array<i32>} : memref<4x12x128xf32, #tpu.memory_space<vmem>>, vector<4x12x128xf32>,
    return
  }
  func.func @transform_0(%arg0: i32) -> (i32, i32) {
    %c0_i32 = arith.constant 0 : i32
    %c0_i32_0 = arith.constant 0 : i32
    return %c0_i32, %arg0 : i32, i32
  }
  func.func @transform_1(%arg0: i32) -> (i32, i32, i32) {
    %c0_i32 = arith.constant 0 : i32
    %c0_i32_0 = arith.constant 0 : i32
    %c0_i32_1 = arith.constant 0 : i32
    return %c0_i32, %c0_i32_0, %arg0 : i32, i32, i32
  }
}

</mosaic_0001>

<llo_original>
// kernel: tpu_custom_call.1
$region0: #{tpu_custom_call.1}
  #allocation0 [shape = 'u32[]', space=smem, size = 0x4, offset = 0x4, fixed_abs, tag = 'smem constant byte address 0x4 - core index']
  #allocation1 [shape = 'u32[72,128]{1,0:T(1,128)}', space=vmem, size = 0x9000, scoped, tag = 'internal scratch']
  %s0 = inlined_call_operand.hbm [shape: f32[4,256], index: 0, kind: input, shape index: {}]
  %s1 = inlined_call_operand.vmem [shape: f32[4,12,256], index: 1, kind: output, shape index: {}]
  %s2 = sld [smem:[#allocation0]]
  $region75: #{tpu_custom_call.1} parent=0
    _
  %s4 = ssub.s32 1, %s2
  %s5 = scalar_select 0, %s4, %s2
  $region1: #{tpu_custom_call.1} parent=0
    #allocation2 [shape = 'u8[4096]{0}', space=vmem, size = 0x1000, scoped, tag = 'input window, operand 0']
    #allocation3 [shape = 's32[2]{0}', space=sflag, size = 0x8, scoped, tag = 'scoped memory for tpu_custom_call.1']
    #allocation4 [shape = 'u8[65536]{0}', space=vmem, size = 0x10000, scoped, tag = 'output window, operand 0']
    %6 = vsyncpa [#allocation3], 0
    %s7 = scalar_lea.sflag [#allocation3], 1
    %8 = vsyncpa %s7, 0
    loop: start=0, step=1, limit=4
    $region2: #{tpu_custom_call.1} parent=1 // loop_pre_header
      _
    $region3: #{tpu_custom_call.1} parent=1 // loop_header
      %s10 = sphi 0, %s14
      %p11 = scmp.ge.s32.totalorder %s10, 4
      %s20 = sphi 0, %s22
      %s23 = sphi 0, %s20
      %s24 = sphi 0, %s23
      %s40 = sphi 0, %s24
      %s46 = sphi 0, %s48
      %s49 = sphi 0, %s46
      %s50 = sphi 0, %s49
      %s66 = sphi 0, %s50
    $region4: #{tpu_custom_call.1} parent=1 // loop_header_branch
      %13 = sbr.rel (%p11) target = $region8
    $region5: #{tpu_custom_call.1} parent=1 // loop_body
      %s15 = ssub.s32 %s10, 1
      %s16 = ssub.s32 %s10, 2
      %s17 = sadd.s32 %s10, 1
      %s18 = ssub.s32 %s10, %s17
      %p19 = scmp.eq.s32.totalorder %s18, 0
      %s21 = sadd.s32 %s20, 1
      %s22 = scalar_select %p19, %s20, %s21
      %p25 = pneg %p19
      %p26 = scmp.eq.s32.totalorder %s10, 1
      %p27 = por %p25, %p26
      %p28 = scmp.ne.s32.totalorder %s20, %s23
      %p29 = scmp.eq.s32.totalorder %s10, 0
      %p30 = por %p28, %p29
      %p31 = scmp.ne.s32.totalorder %s20, %s23
      %p32 = scmp.eq.s32.totalorder %s15, 1
      %p33 = por %p31, %p32
      %p34 = scmp.ne.s32.totalorder %s23, %s24
      %p35 = scmp.eq.s32.totalorder %s15, 0
      %p36 = por %p34, %p35
      %p37 = scmp.ne.s32.totalorder %s23, %s24
      %p38 = scmp.eq.s32.totalorder %s16, 1
      %p39 = por %p37, %p38
      %p41 = scmp.ne.s32.totalorder %s24, %s40
      %p42 = scmp.eq.s32.totalorder %s16, 0
      %p43 = por %p41, %p42
      %s44 = ssub.s32 %s10, %s17
      %p45 = scmp.eq.s32.totalorder %s44, 0
      %s47 = sadd.s32 %s46, 1
      %s48 = scalar_select %p45, %s46, %s47
      %p51 = pneg %p45
      %p52 = scmp.eq.s32.totalorder %s10, 1
      %p53 = por %p51, %p52
      %p54 = scmp.ne.s32.totalorder %s46, %s49
      %p55 = scmp.eq.s32.totalorder %s10, 0
      %p56 = por %p54, %p55
      %p57 = scmp.ne.s32.totalorder %s46, %s49
      %p58 = scmp.eq.s32.totalorder %s15, 1
      %p59 = por %p57, %p58
      %p60 = scmp.ne.s32.totalorder %s49, %s50
      %p61 = scmp.eq.s32.totalorder %s15, 0
      %p62 = por %p60, %p61
      %p63 = scmp.ne.s32.totalorder %s49, %s50
      %p64 = scmp.eq.s32.totalorder %s16, 1
      %p65 = por %p63, %p64
      %p67 = scmp.ne.s32.totalorder %s50, %s66
      %p68 = scmp.eq.s32.totalorder %s16, 0
      %p69 = por %p67, %p68
      %p70 = scmp.le.s32.totalorder 1, %s10
      %p71 = scmp.lt.s32.totalorder %s10, 3
      %p72 = pnand %p70, %p71
      %p73 = pneg %p72
      // Predicated region
      $region9: #{tpu_custom_call.1} parent=5 // pred_check
        _
      $region10: #{tpu_custom_call.1} parent=5 // pred_check_branch
        %75 = sbr.rel (%p72) target = $region12
      $region11: #{tpu_custom_call.1} parent=5 // pred_region
        %s76 = ssub.s32 %s10, 1
      $region12: #{tpu_custom_call.1} parent=5 // pred_fallthru
        _
      %p77 = scmp.lt.s32.totalorder %s10, 2
      // Predicated region
      $region13: #{tpu_custom_call.1} parent=5 // pred_check
        %p78 = pneg %p77
      $region14: #{tpu_custom_call.1} parent=5 // pred_check_branch
        %80 = sbr.rel (%p78) target = $region16
      $region15: #{tpu_custom_call.1} parent=5 // pred_region
        // Predicated region
        $region17: #{tpu_custom_call.1} parent=15 // pred_check
          %p81 = pneg %p30
        $region18: #{tpu_custom_call.1} parent=15 // pred_check_branch
          %83 = sbr.rel (%p81) target = $region20
        $region19: #{tpu_custom_call.1} parent=15 // pred_region
          %s84 = sand.u32 %s20, 1
          %s85 = scalar_lea.sflag [#allocation3], %s84
          %s86 = sand.u32 %s20, 1
          %s87 = smul.addr %s86, 4
          %s88 = scalar_lea.vmem [#allocation2], %s87
          %90 = vsyncadd %s85, 0
          %s91 = smul.addr %s10, 4
          %s92 = scalar_lea.hbm %s0, %s91
          %s94 = sshll.u32 %s92, 4
          %s95 = int_to_ptr.hbm [resolvable:$true] %s94
          %s96 = sshll.u32 %s88, 4
          %s97 = int_to_ptr.vmem [resolvable:$true] %s96
          %99 = dma.hbm_to_vmem [thread:$0]  %s95, 64, %s97, %s85
        $region20: #{tpu_custom_call.1} parent=15 // pred_fallthru
          _
      $region16: #{tpu_custom_call.1} parent=5 // pred_fallthru
        _
      %p100 = scmp.le.s32.totalorder 1, %s10
      %p101 = scmp.lt.s32.totalorder %s10, 3
      %p102 = pnand %p100, %p101
      %p103 = pneg %p102
      // Predicated region
      $region21: #{tpu_custom_call.1} parent=5 // pred_check
        _
      $region22: #{tpu_custom_call.1} parent=5 // pred_check_branch
        %105 = sbr.rel (%p102) target = $region24
      $region23: #{tpu_custom_call.1} parent=5 // pred_region
        %s106 = ssub.s32 %s10, 1
        %s107 = sand.u32 %s23, 1
        %s108 = scalar_lea.sflag [#allocation3], %s107
        %s109 = sand.u32 %s23, 1
        %s110 = smul.addr %s109, 4
        %s111 = scalar_lea.vmem [#allocation2], %s110
        // Predicated region
        $region25: #{tpu_custom_call.1} parent=23 // pred_check
          %p112 = pneg %p36
        $region26: #{tpu_custom_call.1} parent=23 // pred_check_branch
          %114 = sbr.rel (%p112) target = $region28
        $region27: #{tpu_custom_call.1} parent=23 // pred_region
          %116 = dma.done %s108, 64
        $region28: #{tpu_custom_call.1} parent=23 // pred_fallthru
          _
        %s117 = sand.u32 %s23, 1
        %s118 = scalar_lea.sflag [#allocation3], %s117
        %s119 = sand.u32 %s23, 1
        %s120 = smul.addr %s119, 4
        %s121 = scalar_lea.vmem [#allocation2], %s120
        %p122 = pneg %p36
        %p123 = pneg %p33
        %p124 = pneg %p62
        %p125 = pneg %p59
        %s126 = sand.u32 %s49, 1
        %s127 = sand.u32 %s49, 1
        %s128 = smul.addr %s127, 64
        %s129 = scalar_lea.vmem [#allocation4], %s128
        %v130 = vld [vmem:[%s111] sm:$0xf]
        %v131 = vmul.f32 %v130, 3.1415927
        %v132 = vand.u32 2147483647, %v131
        %vm133 = vcmp.le.f32.partialorder %v132, 0.7853982
        %vm134 = vcmp.lt.s32.totalorder %v131, 0
        %v135 = vand.u32 %v131, 2139095040
        %v136 = vshrl.u32 %v135, 23
        %v137 = vsub.s32 %v136, 127
        %v138 = vand.u32 2147483647, %v131
        %v139 = vand.u32 %v138, 8388607
        %v140 = vor.u32 %v139, 8388608
        %v141 = vsub.s32 0, %v140
        %v142 = vadd.s32 %v137, 1
        %vm143 = vcmp.gt.s32.totalorder %v142, 0
        %v144 = vsel %vm143, %v142, 0
        %v145 = vshrl.u32 %v144, 5
        %v146 = vand.u32 %v144, 31
        %v147 = vsub.s32 32, %v146
        %v148 = vshrl.u32 683565275, %v147
        %v149 = vshll.u32 683565275, %v146
        %v150 = vshrl.u32 2475754826, %v147
        %v151 = vor.u32 %v149, %v150
        %v152 = vshll.u32 2475754826, %v146
        %v153 = vshrl.u32 2131351028, %v147
        %v154 = vor.u32 %v152, %v153
        %v155 = vshll.u32 2131351028, %v146
        %v156 = vshrl.u32 2102212464, %v147
        %v157 = vor.u32 %v155, %v156
        %v158 = vshll.u32 2102212464, %v146
        %v159 = vshrl.u32 920167782, %v147
        %v160 = vor.u32 %v158, %v159
        %v161 = vshll.u32 920167782, %v146
        %v162 = vshrl.u32 1326507024, %v147
        %v163 = vor.u32 %v161, %v162
        %vm164 = vcmp.lt.s32.totalorder %v145, 1
        %vm165 = vcmp.lt.s32.totalorder %v145, 2
        %vm166 = vcmp.lt.s32.totalorder %v145, 3
        %vm167 = vcmp.lt.s32.totalorder %v145, 4
        %v168 = vsel %vm164, %v148, %v151
        %v169 = vsel %vm167, %v157, 2102212464
        %v170 = vsel %vm166, %v154, %v169
        %v171 = vsel %vm165, %v168, %v170
        %v172 = vsel %vm164, %v151, %v154
        %v173 = vsel %vm167, %v160, 920167782
        %v174 = vsel %vm166, %v157, %v173
        %v175 = vsel %vm165, %v172, %v174
        %v176 = vsel %vm164, %v154, %v157
        %v177 = vsel %vm167, %v163, 1326507024
        %v178 = vsel %vm166, %v160, %v177
        %v179 = vsel %vm165, %v176, %v178
        %v180 = vshll.u32 %v140, 8
        %v181 = vand.u32 %v180, 65535
        %v182 = vshrl.u32 %v180, 16
        %v183 = vand.u32 %v179, 65535
        %v184 = vshrl.u32 %v179, 16
        %v185 = vmul.u32 %v181, %v183
        %v186 = vmul.u32 %v181, %v184
        %v187 = vmul.u32 %v182, %v183
        %v188 = vmul.u32 %v182, %v184
        %v189 = vshll.u32 %v186, 16
        %v190 = vshrl.u32 %v186, 16
        %v191 = vshll.u32 %v187, 16
        %v192 = vshrl.u32 %v187, 16
        %vm193 = vc.u32 %v185, %v189
        %v194 = vsel %vm193, 1, 0
        %v195 = vadd.s32 %v185, %v189
        %v196 = vadd.s32 %v188, %v194
        %vm197 = vc.u32 %v195, %v191
        %v198 = vsel %vm197, 1, 0
        %v199 = vadd.s32 %v195, %v191
        %v200 = vadd.s32 %v196, %v198
        %v201 = vadd.s32 %v200, %v190
        %v202 = vadd.s32 %v201, %v192
        %v203 = vand.u32 %v180, 65535
        %v204 = vshrl.u32 %v180, 16
        %v205 = vand.u32 %v175, 65535
        %v206 = vshrl.u32 %v175, 16
        %v207 = vmul.u32 %v203, %v205
        %v208 = vmul.u32 %v203, %v206
        %v209 = vmul.u32 %v204, %v205
        %v210 = vmul.u32 %v204, %v206
        %v211 = vshll.u32 %v208, 16
        %v212 = vshrl.u32 %v208, 16
        %v213 = vshll.u32 %v209, 16
        %v214 = vshrl.u32 %v209, 16
        %vm215 = vc.u32 %v207, %v211
        %v216 = vsel %vm215, 1, 0
        %v217 = vadd.s32 %v207, %v211
        %v218 = vadd.s32 %v210, %v216
        %vm219 = vc.u32 %v217, %v213
        %v220 = vsel %vm219, 1, 0
        %v221 = vadd.s32 %v217, %v213
        %v222 = vadd.s32 %v218, %v220
        %v223 = vadd.s32 %v222, %v212
        %v224 = vadd.s32 %v223, %v214
        %v225 = vmul.u32 %v180, %v171
        %v226 = vadd.s32 %v202, %v221
        %vm227 = vc.u32 %v202, %v221
        %v228 = vadd.s32 %v224, 1
        %v229 = vsel %vm227, %v228, %v224
        %v230 = vadd.s32 %v225, %v229
        %v231 = vadd.s32 %v230, 536870912
        %v232 = vshrl.u32 %v231, 30
        %v233 = vshll.u32 %v232, 30
        %v234 = vsub.s32 %v230, %v233
        %vm235 = vcmp.lt.s32.totalorder %v234, 0
        %v236 = vsub.s32 0, %v234
        %v237 = vsel %vm235, %v236, %v234
        %v238 = vclz %v237
        %v239 = vsub.s32 %v238, 2
        %vm240 = vcmp.gt.s32.totalorder 0, %v239
        %v241 = vsel %vm240, 0, %v239
        %v242 = vsub.s32 32, %v241
        %v243 = vshll.u32 %v234, %v241
        %v244 = vshrl.u32 %v226, %v242
        %v245 = vor.u32 %v243, %v244
        %v246 = vsub.s32 4294967266, %v241
        %v247 = vadd.s32 %v246, 127
        %v248 = vshll.u32 %v247, 23
        %v249 = vor.u32 4788187, %v248
        %v250 = vand.u32 2147483647, %v249
        %v252 = vcvt.s32.f32 %v245
        %v253 = vmul.f32 %v252, %v250
        %v254 = vxor.u32 %v253, 2147483648
        %v255 = vsel %vm134, %v254, %v253
        %v256 = vsub.s32 4, %v232
        %v257 = vsel %vm134, %v256, %v232
        %v258 = vsel %vm133, %v131, %v255
        %v259 = vsel %vm133, 0, %v257
        %v260 = vmul.f32 %v258, %v258
        %v261 = vmul.f32 %v260, -0.001358992
        %v262 = vadd.f32 %v261, 0.041655596
        %v263 = vmul.f32 %v260, %v262
        %v264 = vadd.f32 %v263, -0.4999988
        %v265 = vmul.f32 %v260, %v264
        %v266 = vadd.f32 1.0, %v265
        %v267 = vmul.f32 %v258, %v258
        %v268 = vmul.f32 %v267, -0.00019511016
        %v269 = vadd.f32 %v268, 0.008332121
        %v270 = vmul.f32 %v267, %v269
        %v271 = vadd.f32 %v270, -0.16666654
        %v272 = vmul.f32 %v267, %v271
        %v273 = vadd.f32 %v272, 1.0
        %v274 = vmul.f32 %v273, %v258
        %vm275 = vweird.f32 %v131
        %v276 = vadd.s32 %v259, 3
        %v277 = vand.u32 %v276, 3
        %vm278 = vcmp.lt.s32.totalorder %v277, 2
        %vm279 = vcmp.eq.s32.totalorder %v277, 0
        %v280 = vxor.u32 %v274, 2147483648
        %v281 = vsel %vm279, %v266, %v280
        %vm282 = vcmp.eq.s32.totalorder %v277, 2
        %v283 = vxor.u32 %v266, 2147483648
        %v284 = vsel %vm282, %v283, %v274
        %v285 = vsel %vm278, %v281, %v284
        %v286 = vsel %vm275, nan, %v285
        %v287 = vand.u32 2147483647, %v131
        %vm288 = vcmp.le.f32.partialorder %v287, 0.7853982
        %vm289 = vcmp.lt.s32.totalorder %v131, 0
        %v290 = vand.u32 %v131, 2139095040
        %v291 = vshrl.u32 %v290, 23
        %v292 = vsub.s32 %v291, 127
        %v293 = vand.u32 2147483647, %v131
        %v294 = vand.u32 %v293, 8388607
        %v295 = vor.u32 %v294, 8388608
        %v296 = vsub.s32 0, %v295
        %v297 = vadd.s32 %v292, 1
        %vm298 = vcmp.gt.s32.totalorder %v297, 0
        %v299 = vsel %vm298, %v297, 0
        %v300 = vshrl.u32 %v299, 5
        %v301 = vand.u32 %v299, 31
        %v302 = vsub.s32 32, %v301
        %v303 = vshrl.u32 683565275, %v302
        %v304 = vshll.u32 683565275, %v301
        %v305 = vshrl.u32 2475754826, %v302
        %v306 = vor.u32 %v304, %v305
        %v307 = vshll.u32 2475754826, %v301
        %v308 = vshrl.u32 2131351028, %v302
        %v309 = vor.u32 %v307, %v308
        %v310 = vshll.u32 2131351028, %v301
        %v311 = vshrl.u32 2102212464, %v302
        %v312 = vor.u32 %v310, %v311
        %v313 = vshll.u32 2102212464, %v301
        %v314 = vshrl.u32 920167782, %v302
        %v315 = vor.u32 %v313, %v314
        %v316 = vshll.u32 920167782, %v301
        %v317 = vshrl.u32 1326507024, %v302
        %v318 = vor.u32 %v316, %v317
        %vm319 = vcmp.lt.s32.totalorder %v300, 1
        %vm320 = vcmp.lt.s32.totalorder %v300, 2
        %vm321 = vcmp.lt.s32.totalorder %v300, 3
        %vm322 = vcmp.lt.s32.totalorder %v300, 4
        %v323 = vsel %vm319, %v303, %v306
        %v324 = vsel %vm322, %v312, 2102212464
        %v325 = vsel %vm321, %v309, %v324
        %v326 = vsel %vm320, %v323, %v325
        %v327 = vsel %vm319, %v306, %v309
        %v328 = vsel %vm322, %v315, 920167782
        %v329 = vsel %vm321, %v312, %v328
        %v330 = vsel %vm320, %v327, %v329
        %v331 = vsel %vm319, %v309, %v312
        %v332 = vsel %vm322, %v318, 1326507024
        %v333 = vsel %vm321, %v315, %v332
        %v334 = vsel %vm320, %v331, %v333
        %v335 = vshll.u32 %v295, 8
        %v336 = vand.u32 %v335, 65535
        %v337 = vshrl.u32 %v335, 16
        %v338 = vand.u32 %v334, 65535
        %v339 = vshrl.u32 %v334, 16
        %v340 = vmul.u32 %v336, %v338
        %v341 = vmul.u32 %v336, %v339
        %v342 = vmul.u32 %v337, %v338
        %v343 = vmul.u32 %v337, %v339
        %v344 = vshll.u32 %v341, 16
        %v345 = vshrl.u32 %v341, 16
        %v346 = vshll.u32 %v342, 16
        %v347 = vshrl.u32 %v342, 16
        %vm348 = vc.u32 %v340, %v344
        %v349 = vsel %vm348, 1, 0
        %v350 = vadd.s32 %v340, %v344
        %v351 = vadd.s32 %v343, %v349
        %vm352 = vc.u32 %v350, %v346
        %v353 = vsel %vm352, 1, 0
        %v354 = vadd.s32 %v350, %v346
        %v355 = vadd.s32 %v351, %v353
        %v356 = vadd.s32 %v355, %v345
        %v357 = vadd.s32 %v356, %v347
        %v358 = vand.u32 %v335, 65535
        %v359 = vshrl.u32 %v335, 16
        %v360 = vand.u32 %v330, 65535
        %v361 = vshrl.u32 %v330, 16
        %v362 = vmul.u32 %v358, %v360
        %v363 = vmul.u32 %v358, %v361
        %v364 = vmul.u32 %v359, %v360
        %v365 = vmul.u32 %v359, %v361
        %v366 = vshll.u32 %v363, 16
        %v367 = vshrl.u32 %v363, 16
        %v368 = vshll.u32 %v364, 16
        %v369 = vshrl.u32 %v364, 16
        %vm370 = vc.u32 %v362, %v366
        %v371 = vsel %vm370, 1, 0
        %v372 = vadd.s32 %v362, %v366
        %v373 = vadd.s32 %v365, %v371
        %vm374 = vc.u32 %v372, %v368
        %v375 = vsel %vm374, 1, 0
        %v376 = vadd.s32 %v372, %v368
        %v377 = vadd.s32 %v373, %v375
        %v378 = vadd.s32 %v377, %v367
        %v379 = vadd.s32 %v378, %v369
        %v380 = vmul.u32 %v335, %v326
        %v381 = vadd.s32 %v357, %v376
        %vm382 = vc.u32 %v357, %v376
        %v383 = vadd.s32 %v379, 1
        %v384 = vsel %vm382, %v383, %v379
        %v385 = vadd.s32 %v380, %v384
        %v386 = vadd.s32 %v385, 536870912
        %v387 = vshrl.u32 %v386, 30
        %v388 = vshll.u32 %v387, 30
        %v389 = vsub.s32 %v385, %v388
        %vm390 = vcmp.lt.s32.totalorder %v389, 0
        %v391 = vsub.s32 0, %v389
        %v392 = vsel %vm390, %v391, %v389
        %v393 = vclz %v392
        %v394 = vsub.s32 %v393, 2
        %vm395 = vcmp.gt.s32.totalorder 0, %v394
        %v396 = vsel %vm395, 0, %v394
        %v397 = vsub.s32 32, %v396
        %v398 = vshll.u32 %v389, %v396
        %v399 = vshrl.u32 %v381, %v397
        %v400 = vor.u32 %v398, %v399
        %v401 = vsub.s32 4294967266, %v396
        %v402 = vadd.s32 %v401, 127
        %v403 = vshll.u32 %v402, 23
        %v404 = vor.u32 4788187, %v403
        %v405 = vand.u32 2147483647, %v404
        %v407 = vcvt.s32.f32 %v400
        %v408 = vmul.f32 %v407, %v405
        %v409 = vxor.u32 %v408, 2147483648
        %v410 = vsel %vm289, %v409, %v408
        %v411 = vsub.s32 4, %v387
        %v412 = vsel %vm289, %v411, %v387
        %v413 = vsel %vm288, %v131, %v410
        %v414 = vsel %vm288, 0, %v412
        %v415 = vmul.f32 %v413, %v413
        %v416 = vmul.f32 %v415, -0.001358992
        %v417 = vadd.f32 %v416, 0.041655596
        %v418 = vmul.f32 %v415, %v417
        %v419 = vadd.f32 %v418, -0.4999988
        %v420 = vmul.f32 %v415, %v419
        %v421 = vadd.f32 1.0, %v420
        %v422 = vmul.f32 %v413, %v413
        %v423 = vmul.f32 %v422, -0.00019511016
        %v424 = vadd.f32 %v423, 0.008332121
        %v425 = vmul.f32 %v422, %v424
        %v426 = vadd.f32 %v425, -0.16666654
        %v427 = vmul.f32 %v422, %v426
        %v428 = vadd.f32 %v427, 1.0
        %v429 = vmul.f32 %v428, %v413
        %vm430 = vweird.f32 %v131
        %v431 = vand.u32 %v414, 3
        %vm432 = vcmp.lt.s32.totalorder %v431, 2
        %vm433 = vcmp.eq.s32.totalorder %v431, 0
        %v434 = vxor.u32 %v429, 2147483648
        %v435 = vsel %vm433, %v421, %v434
        %vm436 = vcmp.eq.s32.totalorder %v431, 2
        %v437 = vxor.u32 %v421, 2147483648
        %v438 = vsel %vm436, %v437, %v429
        %v439 = vsel %vm432, %v435, %v438
        %v440 = vsel %vm430, nan, %v439
        %v441 = vmul.f32 %v286, 2.0
        %v442 = vmul.f32 %v441, %v440
        %v443 = vmul.f32 %v440, %v440
        %v444 = vmul.f32 %v286, %v286
        %v445 = vsub.f32 %v443, %v444
        %v446 = vmul.f32 %v442, 2.0
        %v447 = vmul.f32 %v446, %v445
        %v448 = vmul.f32 %v445, %v445
        %v449 = vmul.f32 %v442, %v442
        %v450 = vsub.f32 %v448, %v449
        %v451 = vmul.f32 %v447, 2.0
        %v452 = vmul.f32 %v451, %v450
        %v453 = vmul.f32 %v450, %v450
        %v454 = vmul.f32 %v447, %v447
        %v455 = vsub.f32 %v453, %v454
        %v456 = vmul.f32 %v452, 2.0
        %v457 = vmul.f32 %v456, %v455
        %v458 = vmul.f32 %v455, %v455
        %v459 = vmul.f32 %v452, %v452
        %v460 = vsub.f32 %v458, %v459
        %v461 = vmul.f32 %v457, 2.0
        %v462 = vmul.f32 %v461, %v460
        %v463 = vmul.f32 %v460, %v460
        %v464 = vmul.f32 %v457, %v457
        %v465 = vsub.f32 %v463, %v464
        %v467 = vrot.slane %v286, 1
        %v468 = vrot.slane %v286, 2
        %v469 = vrot.slane %v286, 3
        %v474 = vrot.slane %v442, 1
        %v475 = vrot.slane %v442, 2
        %v476 = vrot.slane %v442, 3
        %v478 = vrot.slane %v447, 1
        %v479 = vrot.slane %v447, 2
        %v480 = vrot.slane %v447, 3
        %v482 = vrot.slane %v452, 1
        %v483 = vrot.slane %v452, 2
        %v484 = vrot.slane %v452, 3
        %v486 = vrot.slane %v457, 1
        %v487 = vrot.slane %v457, 2
        %v488 = vrot.slane %v457, 3
        %v490 = vrot.slane %v462, 1
        %v491 = vrot.slane %v462, 2
        %v492 = vrot.slane %v462, 3
        %v493 = vperm.slane %v442, 0
        %v494 = vperm.slane %v474, 0
        %v495 = vperm.slane %v475, 0
        %v496 = vperm.slane %v476, 0
        %v501 = vperm.slane %v447, 0
        %v502 = vperm.slane %v478, 0
        %v503 = vperm.slane %v479, 0
        %v504 = vperm.slane %v480, 0
        %v509 = vperm.slane %v452, 0
        %v510 = vperm.slane %v482, 0
        %v511 = vperm.slane %v483, 0
        %v512 = vperm.slane %v484, 0
        %v517 = vperm.slane %v457, 0
        %v518 = vperm.slane %v486, 0
        %v519 = vperm.slane %v487, 0
        %v520 = vperm.slane %v488, 0
        %v525 = vperm.slane %v462, 0
        %v526 = vperm.slane %v490, 0
        %v527 = vperm.slane %v491, 0
        %v528 = vperm.slane %v492, 0
        %vm533 = vcmask 1040384
        %v534 = vsel %vm533, %v286, %v493
        %v535 = vsel %vm533, %v467, %v494
        %v536 = vsel %vm533, %v468, %v495
        %v537 = vsel %vm533, %v469, %v496
        %vm538 = vcmask 1041408
        %v539 = vsel %vm538, %v534, %v501
        %v540 = vsel %vm538, %v535, %v502
        %v541 = vsel %vm538, %v536, %v503
        %v542 = vsel %vm538, %v537, %v504
        %vm543 = vcmask 1042432
        %v544 = vsel %vm543, %v539, %v509
        %v545 = vsel %vm543, %v540, %v510
        %v546 = vsel %vm543, %v541, %v511
        %v547 = vsel %vm543, %v542, %v512
        %vm548 = vcmask 1043456
        %v549 = vsel %vm548, %v544, %v517
        %v550 = vsel %vm548, %v545, %v518
        %v551 = vsel %vm548, %v546, %v519
        %v552 = vsel %vm548, %v547, %v520
        %vm553 = vcmask 1044480
        %v554 = vsel %vm553, %v549, %v525
        %v555 = vsel %vm553, %v550, %v526
        %v556 = vsel %vm553, %v551, %v527
        %v557 = vsel %vm553, %v552, %v528
        %v559 = vrot.slane %v440, 1
        %v560 = vrot.slane %v440, 2
        %v561 = vrot.slane %v440, 3
        %v566 = vrot.slane %v445, 1
        %v567 = vrot.slane %v445, 2
        %v568 = vrot.slane %v445, 3
        %v570 = vrot.slane %v450, 1
        %v571 = vrot.slane %v450, 2
        %v572 = vrot.slane %v450, 3
        %v574 = vrot.slane %v455, 1
        %v575 = vrot.slane %v455, 2
        %v576 = vrot.slane %v455, 3
        %v578 = vrot.slane %v460, 1
        %v579 = vrot.slane %v460, 2
        %v580 = vrot.slane %v460, 3
        %v582 = vrot.slane %v465, 1
        %v583 = vrot.slane %v465, 2
        %v584 = vrot.slane %v465, 3
        %v585 = vperm.slane %v445, 0
        %v586 = vperm.slane %v566, 0
        %v587 = vperm.slane %v567, 0
        %v588 = vperm.slane %v568, 0
        %v593 = vperm.slane %v450, 0
        %v594 = vperm.slane %v570, 0
        %v595 = vperm.slane %v571, 0
        %v596 = vperm.slane %v572, 0
        %v601 = vperm.slane %v455, 0
        %v602 = vperm.slane %v574, 0
        %v603 = vperm.slane %v575, 0
        %v604 = vperm.slane %v576, 0
        %v609 = vperm.slane %v460, 0
        %v610 = vperm.slane %v578, 0
        %v611 = vperm.slane %v579, 0
        %v612 = vperm.slane %v580, 0
        %v617 = vperm.slane %v465, 0
        %v618 = vperm.slane %v582, 0
        %v619 = vperm.slane %v583, 0
        %v620 = vperm.slane %v584, 0
        %v625 = vsel %vm533, %v440, %v585
        %v626 = vsel %vm533, %v559, %v586
        %v627 = vsel %vm533, %v560, %v587
        %v628 = vsel %vm533, %v561, %v588
        %v629 = vsel %vm538, %v625, %v593
        %v630 = vsel %vm538, %v626, %v594
        %v631 = vsel %vm538, %v627, %v595
        %v632 = vsel %vm538, %v628, %v596
        %v633 = vsel %vm543, %v629, %v601
        %v634 = vsel %vm543, %v630, %v602
        %v635 = vsel %vm543, %v631, %v603
        %v636 = vsel %vm543, %v632, %v604
        %v637 = vsel %vm548, %v633, %v609
        %v638 = vsel %vm548, %v634, %v610
        %v639 = vsel %vm548, %v635, %v611
        %v640 = vsel %vm548, %v636, %v612
        %v641 = vsel %vm553, %v637, %v617
        %v642 = vsel %vm553, %v638, %v618
        %v643 = vsel %vm553, %v639, %v619
        %v644 = vsel %vm553, %v640, %v620
        %v649 = vrot.slane %v641, 2
        %v650 = vrot.slane %v642, 2
        %v651 = vrot.slane %v643, 2
        %v652 = vrot.slane %v644, 2
        %vm657 = vcmask 1045504
        %v658 = vsel %vm657, %v554, %v649
        %v659 = vsel %vm657, %v555, %v650
        %v660 = vsel %vm657, %v556, %v651
        %v661 = vsel %vm657, %v557, %v652
        %662 = vst [vmem:[%s129] sm:$0xff] %v658
        %663 = vst [vmem:[%s129 + $0x8] sm:$0xf] %v649
        %664 = vst [vmem:[%s129 + $0x10] sm:$0xff] %v659
        %665 = vst [vmem:[%s129 + $0x18] sm:$0xf] %v650
        %666 = vst [vmem:[%s129 + $0x20] sm:$0xff] %v660
        %667 = vst [vmem:[%s129 + $0x28] sm:$0xf] %v651
        %668 = vst [vmem:[%s129 + $0x30] sm:$0xff] %v661
        %669 = vst [vmem:[%s129 + $0x38] sm:$0xf] %v652
        %s670 = sand.u32 %s49, 1
        %s671 = sand.u32 %s49, 1
        %s672 = smul.addr %s671, 64
        %s673 = scalar_lea.vmem [#allocation4], %s672
        // Predicated region
        $region29: #{tpu_custom_call.1} parent=23 // pred_check
          %p674 = pneg %p59
        $region30: #{tpu_custom_call.1} parent=23 // pred_check_branch
          %676 = sbr.rel (%p674) target = $region32
        $region31: #{tpu_custom_call.1} parent=23 // pred_region
          %s677 = smul.addr %s15, 8
          %s678 = scalar_lea.vmem %s1, %s677
          // Predicated region
          $region33: #{tpu_custom_call.1} parent=31 // pred_check
            _
          $region34: #{tpu_custom_call.1} parent=31 // pred_check_branch
            %680 = sbr.rel (0) target = $region36
          $region35: #{tpu_custom_call.1} parent=31 // pred_region
            // Predicated region
            $region37: #{tpu_custom_call.1} parent=35 // pred_check
              _
            $region38: #{tpu_custom_call.1} parent=35 // pred_check_branch
              %682 = sbr.rel (0) target = $region40
            $region39: #{tpu_custom_call.1} parent=35 // pred_region
              // Predicated region
              $region52: #{tpu_custom_call.1} parent=39 // pred_check
                _
              $region53: #{tpu_custom_call.1} parent=39 // pred_check_branch
                %712 = sbr.rel (0) target = $region55
              $region54: #{tpu_custom_call.1} parent=39 // pred_region
                loop: start=0, step=1, limit=1
                $region56: #{tpu_custom_call.1} parent=54 // loop_pre_header
                  _
                $region57: #{tpu_custom_call.1} parent=54 // loop_header
                  %s714 = sphi 0, %s718
                  %p715 = scmp.ge.s32.totalorder %s714, 1
                  %s719 = sphi %s673, %s673
                  %s720 = sphi %s678, %s678
                $region58: #{tpu_custom_call.1} parent=54 // loop_header_branch
                  %717 = sbr.rel (%p715) target = $region62
                $region59: #{tpu_custom_call.1} parent=54 // loop_body
                  %v721 = vld [vmem:[%s719] sm:$0xff]
                  %722 = vst [vmem:[%s720] sm:$0xff] %v721
                  %v723 = vld [vmem:[%s719 + $0x8] sm:$0xff]
                  %724 = vst [vmem:[%s720 + $0x10] sm:$0xff] %v723
                  %v725 = vld [vmem:[%s719 + $0x10] sm:$0xff]
                  %726 = vst [vmem:[%s720 + $0x20] sm:$0xff] %v725
                  %v727 = vld [vmem:[%s719 + $0x18] sm:$0xff]
                  %728 = vst [vmem:[%s720 + $0x30] sm:$0xff] %v727
                  %v729 = vld [vmem:[%s719 + $0x20] sm:$0xff]
                  %730 = vst [vmem:[%s720 + $0x40] sm:$0xff] %v729
                  %v731 = vld [vmem:[%s719 + $0x28] sm:$0xff]
                  %732 = vst [vmem:[%s720 + $0x50] sm:$0xff] %v731
                  %v733 = vld [vmem:[%s719 + $0x30] sm:$0xff]
                  %734 = vst [vmem:[%s720 + $0x60] sm:$0xff] %v733
                  %v735 = vld [vmem:[%s719 + $0x38] sm:$0xff]
                  %736 = vst [vmem:[%s720 + $0x70] sm:$0xff] %v735
                $region60: #{tpu_custom_call.1} parent=54 // loop_footer
                  %s718 = sadd.s32 1, %s714
                $region61: #{tpu_custom_call.1} parent=54 // loop_footer_branch
                  %713 = sbr.rel target = $region57
                $region62: #{tpu_custom_call.1} parent=54 // loop_exit
                  _
              $region55: #{tpu_custom_call.1} parent=39 // pred_fallthru
                _
              // Predicated region
              $region63: #{tpu_custom_call.1} parent=39 // pred_check
                _
              $region64: #{tpu_custom_call.1} parent=39 // pred_check_branch
                %738 = sbr.rel target = $region66
              $region65: #{tpu_custom_call.1} parent=39 // pred_region
                _
              $region66: #{tpu_custom_call.1} parent=39 // pred_fallthru
                _
            $region40: #{tpu_custom_call.1} parent=35 // pred_fallthru
              _
            // Predicated region
            $region41: #{tpu_custom_call.1} parent=35 // pred_check
              _
            $region42: #{tpu_custom_call.1} parent=35 // pred_check_branch
              %684 = sbr.rel target = $region44
            $region43: #{tpu_custom_call.1} parent=35 // pred_region
              %s686 = ssub.s32 256, 1
              loop: start=0, step=1, limit=1
              $region45: #{tpu_custom_call.1} parent=43 // loop_pre_header
                _
              $region46: #{tpu_custom_call.1} parent=43 // loop_header
                %s688 = sphi 0, %s692
                %p689 = scmp.ge.s32.totalorder %s688, 1
                %s693 = sphi %s673, %s673
                %s694 = sphi %s678, %s678
              $region47: #{tpu_custom_call.1} parent=43 // loop_header_branch
                %691 = sbr.rel (%p689) target = $region51
              $region48: #{tpu_custom_call.1} parent=43 // loop_body
                %v695 = vld [vmem:[%s693] sm:%s686]
                %696 = vst [vmem:[%s694] sm:%s686] %v695
                %v697 = vld [vmem:[%s693 + $0x8] sm:%s686]
                %698 = vst [vmem:[%s694 + $0x10] sm:%s686] %v697
                %v699 = vld [vmem:[%s693 + $0x10] sm:%s686]
                %700 = vst [vmem:[%s694 + $0x20] sm:%s686] %v699
                %v701 = vld [vmem:[%s693 + $0x18] sm:%s686]
                %702 = vst [vmem:[%s694 + $0x30] sm:%s686] %v701
                %v703 = vld [vmem:[%s693 + $0x20] sm:%s686]
                %704 = vst [vmem:[%s694 + $0x40] sm:%s686] %v703
                %v705 = vld [vmem:[%s693 + $0x28] sm:%s686]
                %706 = vst [vmem:[%s694 + $0x50] sm:%s686] %v705
                %v707 = vld [vmem:[%s693 + $0x30] sm:%s686]
                %708 = vst [vmem:[%s694 + $0x60] sm:%s686] %v707
                %v709 = vld [vmem:[%s693 + $0x38] sm:%s686]
                %710 = vst [vmem:[%s694 + $0x70] sm:%s686] %v709
              $region49: #{tpu_custom_call.1} parent=43 // loop_footer
                %s692 = sadd.s32 1, %s688
              $region50: #{tpu_custom_call.1} parent=43 // loop_footer_branch
                %687 = sbr.rel target = $region46
              $region51: #{tpu_custom_call.1} parent=43 // loop_exit
                _
            $region44: #{tpu_custom_call.1} parent=35 // pred_fallthru
              _
          $region36: #{tpu_custom_call.1} parent=31 // pred_fallthru
            _
          %739 = vnop
        $region32: #{tpu_custom_call.1} parent=23 // pred_fallthru
          _
      $region24: #{tpu_custom_call.1} parent=5 // pred_fallthru
        _
      %p740 = scmp.le.s32.totalorder 2, %s10
      // Predicated region
      $region67: #{tpu_custom_call.1} parent=5 // pred_check
        %p741 = pneg %p740
      $region68: #{tpu_custom_call.1} parent=5 // pred_check_branch
        %743 = sbr.rel (%p741) target = $region70
      $region69: #{tpu_custom_call.1} parent=5 // pred_region
        %s744 = ssub.s32 %s10, 2
        // Predicated region
        $region71: #{tpu_custom_call.1} parent=69 // pred_check
          %p745 = pneg %p65
        $region72: #{tpu_custom_call.1} parent=69 // pred_check_branch
          %747 = sbr.rel (%p745) target = $region74
        $region73: #{tpu_custom_call.1} parent=69 // pred_region
          %s748 = sand.u32 %s50, 1
          %s749 = sand.u32 %s50, 1
          %s750 = smul.addr %s749, 64
          %s751 = scalar_lea.vmem [#allocation4], %s750
        $region74: #{tpu_custom_call.1} parent=69 // pred_fallthru
          _
      $region70: #{tpu_custom_call.1} parent=5 // pred_fallthru
        _
    $region6: #{tpu_custom_call.1} parent=1 // loop_footer
      %s14 = sadd.s32 1, %s10
    $region7: #{tpu_custom_call.1} parent=1 // loop_footer_branch
      %9 = sbr.rel target = $region3
    $region8: #{tpu_custom_call.1} parent=1 // loop_exit
      _
    %752 = vsyncpa [#allocation3], 1
    %s753 = scalar_lea.sflag [#allocation3], 1
    %754 = vsyncpa %s753, 1

</llo_original>
